<compile_context>
chip_gen: v6e
topology: v6e:2x2x1
jax: 0.10.0
libtpu: 0.0.40
codegen_flags: <defaults>
</compile_context>

<pallas_src>
import functools

import jax
import jax.numpy as jnp
from jax import lax
from jax.experimental import pallas as pl
from jax.experimental.pallas import tpu as pltpu


def _contrastive_loss_kernel(img_ref, txt_ref, loss_ref,
                             img_scr, m_scr, l_scr, diag_scr, *, inv_temp):
    qi = pl.program_id(0)
    ki = pl.program_id(1)
    nk = pl.num_programs(1)

    eps = 1e-12

    @pl.when(ki == 0)
    def _init():
        # Online-logsumexp state for this img row tile.
        m_scr[...] = jnp.full_like(m_scr, -jnp.inf)
        l_scr[...] = jnp.zeros_like(l_scr)
        # Normalize the img row tile once per row tile and cache it (bf16) in VMEM.
        # torch.nn.functional.normalize(x, p=2, dim=1): x / max(||x||, eps);
        # rsqrt(max(sumsq, eps^2)) == 1 / max(||x||, eps); rsqrt runs on the EUP slot.
        img = img_ref[...].astype(jnp.float32)                       # (T, D)
        img_inv = lax.rsqrt(
            jnp.maximum(jnp.sum(img * img, axis=1, keepdims=True), eps * eps))
        # Fold 1/temperature into the img operand (B*D muls total, not B*B).
        img_scr[...] = (img * (img_inv * inv_temp)).astype(jnp.bfloat16)

    img_n = img_scr[...]                                              # (T, D) bf16

    # Normalize the streaming txt tile (unavoidable per step; O(T*D) vs O(T*T*D) matmul).
    txt = txt_ref[...].astype(jnp.float32)                            # (T, D)
    txt_inv = lax.rsqrt(
        jnp.maximum(jnp.sum(txt * txt, axis=1, keepdims=True), eps * eps))
    txt_n = (txt * txt_inv).astype(jnp.bfloat16)                      # (T, D) bf16

    # Contract last dims directly: no explicit transpose / relayout of the txt tile.
    s = lax.dot_general(img_n, txt_n,
                        dimension_numbers=(((1,), (1,)), ((), ())),
                        preferred_element_type=jnp.float32)           # (T, T) f32

    # Online logsumexp update across txt tiles.
    m_prev = m_scr[...]
    m_new = jnp.maximum(m_prev, jnp.max(s, axis=1, keepdims=True))
    alpha = jnp.exp(m_prev - m_new)
    l_scr[...] = alpha * l_scr[...] + jnp.sum(jnp.exp(s - m_new), axis=1, keepdims=True)
    m_scr[...] = m_new

    # Target (diagonal) logit: img rows of tile qi pair with txt rows of tile ki == qi.
    # This fires exactly once per row tile (qi < nk), always before the finalize read,
    # so diag_scr needs no zero-init.
    @pl.when(qi == ki)
    def _diag():
        diag_scr[...] = jnp.sum(img_n.astype(jnp.float32) * txt_n.astype(jnp.float32),
                                axis=1, keepdims=True)

    @pl.when(ki == nk - 1)
    def _finalize():
        # per-row cross-entropy: logsumexp(row) - logits[i, i]
        loss_ref[...] = m_scr[...] + jnp.log(l_scr[...]) - diag_scr[...]


def _pick_tile(B, max_tile=256):
    """Largest divisor of B that is a multiple of 8 and <= max_tile; else full B."""
    if B <= max_tile:
        return B
    t = max_tile - (max_tile % 8)
    while t >= 8:
        if B % t == 0:
            return t
        t -= 8
    return B   # fallback: single full-array tile


def contrastive_loss(image_features, text_features, temperature=1.0):
    B, D = image_features.shape
    assert text_features.shape == (B, D)

    T = _pick_tile(B)
    grid = (B // T, B // T)
    kernel = functools.partial(_contrastive_loss_kernel,
                               inv_temp=float(1.0 / temperature))

    per_row = pl.pallas_call(
        kernel,
        out_shape=jax.ShapeDtypeStruct((B, 1), jnp.float32),
        grid_spec=pltpu.PrefetchScalarGridSpec(
            num_scalar_prefetch=0,
            grid=grid,
            in_specs=[
                # img row tile: constant across the ki (reduction) axis -> stays resident
                pl.BlockSpec((T, D), lambda qi, ki: (qi, 0)),
                # txt tile streams along ki with default double-buffering
                pl.BlockSpec((T, D), lambda qi, ki: (ki, 0)),
            ],
            out_specs=pl.BlockSpec((T, 1), lambda qi, ki: (qi, 0)),
            scratch_shapes=[
                pltpu.VMEM((T, D), jnp.bfloat16),  # cached normalized+scaled img tile
                pltpu.VMEM((T, 1), jnp.float32),   # running max m
                pltpu.VMEM((T, 1), jnp.float32),   # running sum l
                pltpu.VMEM((T, 1), jnp.float32),   # diagonal (target) logit
            ],
        ),
        compiler_params=pltpu.CompilerParams(
            # row-tile axis parallel (2 TCs on v7x), reduction axis arbitrary (last)
            dimension_semantics=("parallel", "arbitrary"),
            # raise scoped VMEM above the 16/32 MiB defaults, stay under v7x's 64 MiB
            vmem_limit_bytes=48 * 1024 * 1024,
        ),
    )(image_features, text_features)

    # Tiny final reduction (mean over B rows) in plain JAX.
    return jnp.mean(per_row[:, 0])


def _reference_loss(image_features, text_features, temperature=1.0):
    eps = 1e-12
    img = image_features / jnp.maximum(
        jnp.linalg.norm(image_features, axis=1, keepdims=True), eps)
    txt = text_features / jnp.maximum(
        jnp.linalg.norm(text_features, axis=1, keepdims=True), eps)
    logits = img @ txt.T / temperature
    targets = jnp.arange(logits.shape[0])
    log_probs = jax.nn.log_softmax(logits, axis=1)
    return -jnp.mean(log_probs[jnp.arange(logits.shape[0]), targets])


if __name__ == "__main__":
    B, D = 8, 32  # small shapes consistent with the (batch, hidden) forward
    key = jax.random.PRNGKey(0)
    k_img, k_txt = jax.random.split(key)
    image_features = jax.random.normal(k_img, (B, D), dtype=jnp.float32)
    text_features = jax.random.normal(k_txt, (B, D), dtype=jnp.float32)

    ok = True
    for temp in (1.0, 0.5):
        loss = contrastive_loss(image_features, text_features, temperature=temp)
        loss = jax.block_until_ready(loss)
        ref = _reference_loss(image_features, text_features, temperature=temp)
        # bf16 MXU operands (f32 accumulation) perturb logits by ~1e-3 relative,
        # so the tolerance is relaxed vs. a pure-f32 reference.
        if not jnp.allclose(loss, ref, atol=5e-3, rtol=5e-3):
            ok = False
            print("MISMATCH", temp, loss, ref)

    assert ok
    print("KERNEL_OK")
</pallas_src>

<mosaic_0001>
module attributes {stable_mosaic.version = 11 : i64} {
  func.func @_contrastive_loss_kernel(%arg0: i32, %arg1: i32, %arg2: memref<8x32xf32, #tpu.memory_space<vmem>>, %arg3: memref<8x32xf32, #tpu.memory_space<vmem>>, %arg4: memref<8x1xf32, #tpu.memory_space<vmem>>, %arg5: memref<8x32xbf16, #tpu.memory_space<vmem>>, %arg6: memref<8x1xf32, #tpu.memory_space<vmem>>, %arg7: memref<8x1xf32, #tpu.memory_space<vmem>>, %arg8: memref<8x1xf32, #tpu.memory_space<vmem>>) attributes {dimension_semantics = [#tpu.dimension_semantics<parallel>, #tpu.dimension_semantics<arbitrary>], iteration_bounds = array<i64: 1, 1>, scalar_prefetch = 0 : i64, scratch_operands = 4 : i64, tpu.core_type = #tpu.core_type<tc>, window_params = [{transform_indices = @transform_0, window_bounds = array<i64: 8, 32>}, {transform_indices = @transform_1, window_bounds = array<i64: 8, 32>}, {transform_indices = @transform_2, window_bounds = array<i64: 8, 1>}]} {
    %c0_i32 = arith.constant 0 : i32
    %0 = arith.cmpi eq, %arg1, %c0_i32 : i32
    %1 = arith.extui %0 : i1 to i32
    %c0_i32_0 = arith.constant 0 : i32
    %2 = arith.cmpi ne, %1, %c0_i32_0 : i32
    scf.if %2 {
      %cst_19 = arith.constant 0xFF800000 : f32
      %37 = vector.broadcast %cst_19 : f32 to vector<8x1xf32>
      %c0_20 = arith.constant 0 : index
      %c0_21 = arith.constant 0 : index
      %38 = vector.load %arg6[%c0_20, %c0_21] : memref<8x1xf32, #tpu.memory_space<vmem>>, vector<8x1xf32>
      tpu.vector_store %arg6[%c0_20, %c0_21], %37 {strides = array<i32>} : memref<8x1xf32, #tpu.memory_space<vmem>>, vector<8x1xf32>,
      %cst_22 = arith.constant 0.000000e+00 : f32
      %39 = vector.broadcast %cst_22 : f32 to vector<8x1xf32>
      %c0_23 = arith.constant 0 : index
      %c0_24 = arith.constant 0 : index
      %40 = vector.load %arg7[%c0_23, %c0_24] : memref<8x1xf32, #tpu.memory_space<vmem>>, vector<8x1xf32>
      tpu.vector_store %arg7[%c0_23, %c0_24], %39 {strides = array<i32>} : memref<8x1xf32, #tpu.memory_space<vmem>>, vector<8x1xf32>,
      %c0_25 = arith.constant 0 : index
      %c0_26 = arith.constant 0 : index
      %41 = vector.load %arg2[%c0_25, %c0_26] : memref<8x32xf32, #tpu.memory_space<vmem>>, vector<8x32xf32>
      %42 = arith.mulf %41, %41 : vector<8x32xf32>
      %cst_27 = arith.constant dense<0.000000e+00> : vector<8xf32>
      %43 = vector.multi_reduction <add>, %42, %cst_27 [1] : vector<8x32xf32> to vector<8xf32>
      %44 = vector.shape_cast %43 : vector<8xf32> to vector<8x1xf32>
      %cst_28 = arith.constant 1.000000e-24 : f32
      %45 = vector.broadcast %cst_28 : f32 to vector<8x1xf32>
      %46 = arith.maximumf %44, %45 : vector<8x1xf32>
      %47 = math.rsqrt %46 : vector<8x1xf32>
      %cst_29 = arith.constant 1.000000e+00 : f32
      %48 = vector.broadcast %cst_29 : f32 to vector<8x1xf32>
      %49 = arith.mulf %47, %48 : vector<8x1xf32>
      %50 = vector.broadcast %49 : vector<8x1xf32> to vector<8x32xf32>
      %51 = arith.mulf %41, %50 : vector<8x32xf32>
      %52 = arith.truncf %51 : vector<8x32xf32> to vector<8x32xbf16>
      %c0_30 = arith.constant 0 : index
      %c0_31 = arith.constant 0 : index
      %53 = vector.load %arg5[%c0_30, %c0_31] : memref<8x32xbf16, #tpu.memory_space<vmem>>, vector<8x32xbf16>
      tpu.vector_store %arg5[%c0_30, %c0_31], %52 {strides = array<i32>} : memref<8x32xbf16, #tpu.memory_space<vmem>>, vector<8x32xbf16>,
    } else {
    }
    %c0 = arith.constant 0 : index
    %c0_1 = arith.constant 0 : index
    %3 = vector.load %arg5[%c0, %c0_1] : memref<8x32xbf16, #tpu.memory_space<vmem>>, vector<8x32xbf16>
    %c0_2 = arith.constant 0 : index
    %c0_3 = arith.constant 0 : index
    %4 = vector.load %arg3[%c0_2, %c0_3] : memref<8x32xf32, #tpu.memory_space<vmem>>, vector<8x32xf32>
    %5 = arith.mulf %4, %4 : vector<8x32xf32>
    %cst = arith.constant dense<0.000000e+00> : vector<8xf32>
    %6 = vector.multi_reduction <add>, %5, %cst [1] : vector<8x32xf32> to vector<8xf32>
    %7 = vector.shape_cast %6 : vector<8xf32> to vector<8x1xf32>
    %cst_4 = arith.constant 1.000000e-24 : f32
    %8 = vector.broadcast %cst_4 : f32 to vector<8x1xf32>
    %9 = arith.maximumf %7, %8 : vector<8x1xf32>
    %10 = math.rsqrt %9 : vector<8x1xf32>
    %11 = vector.broadcast %10 : vector<8x1xf32> to vector<8x32xf32>
    %12 = arith.mulf %4, %11 : vector<8x32xf32>
    %13 = arith.truncf %12 : vector<8x32xf32> to vector<8x32xbf16>
    %cst_5 = arith.constant dense<0.000000e+00> : vector<8x8xf32>
    %14 = tpu.matmul %3, %13, %cst_5 {dimension_numbers = #tpu.dot_dimension_numbers<[1], [1], [0], [0], [0, 0, 1, 0], [], []>} : vector<8x32xbf16>, vector<8x32xbf16>, vector<8x8xf32> -> vector<8x8xf32>
    %c0_6 = arith.constant 0 : index
    %c0_7 = arith.constant 0 : index
    %15 = vector.load %arg6[%c0_6, %c0_7] : memref<8x1xf32, #tpu.memory_space<vmem>>, vector<8x1xf32>
    %cst_8 = arith.constant dense<0xFF800000> : vector<8xf32>
    %16 = vector.multi_reduction <maximumf>, %14, %cst_8 [1] : vector<8x8xf32> to vector<8xf32>
    %17 = vector.shape_cast %16 : vector<8xf32> to vector<8x1xf32>
    %18 = arith.maximumf %15, %17 : vector<8x1xf32>
    %19 = arith.subf %15, %18 : vector<8x1xf32>
    %20 = math.exp %19 : vector<8x1xf32>
    %c0_9 = arith.constant 0 : index
    %c0_10 = arith.constant 0 : index
    %21 = vector.load %arg7[%c0_9, %c0_10] : memref<8x1xf32, #tpu.memory_space<vmem>>, vector<8x1xf32>
    %22 = arith.mulf %20, %21 : vector<8x1xf32>
    %23 = vector.broadcast %18 : vector<8x1xf32> to vector<8x8xf32>
    %24 = arith.subf %14, %23 : vector<8x8xf32>
    %25 = math.exp %24 : vector<8x8xf32>
    %cst_11 = arith.constant dense<0.000000e+00> : vector<8xf32>
    %26 = vector.multi_reduction <add>, %25, %cst_11 [1] : vector<8x8xf32> to vector<8xf32>
    %27 = vector.shape_cast %26 : vector<8xf32> to vector<8x1xf32>
    %28 = arith.addf %22, %27 : vector<8x1xf32>
    %c0_12 = arith.constant 0 : index
    %c0_13 = arith.constant 0 : index
    %29 = vector.load %arg7[%c0_12, %c0_13] : memref<8x1xf32, #tpu.memory_space<vmem>>, vector<8x1xf32>
    tpu.vector_store %arg7[%c0_12, %c0_13], %28 {strides = array<i32>} : memref<8x1xf32, #tpu.memory_space<vmem>>, vector<8x1xf32>,
    %c0_14 = arith.constant 0 : index
    %c0_15 = arith.constant 0 : index
    %30 = vector.load %arg6[%c0_14, %c0_15] : memref<8x1xf32, #tpu.memory_space<vmem>>, vector<8x1xf32>
    tpu.vector_store %arg6[%c0_14, %c0_15], %18 {strides = array<i32>} : memref<8x1xf32, #tpu.memory_space<vmem>>, vector<8x1xf32>,
    %31 = arith.cmpi eq, %arg0, %arg1 : i32
    %32 = arith.extui %31 : i1 to i32
    %c0_i32_16 = arith.constant 0 : i32
    %33 = arith.cmpi ne, %32, %c0_i32_16 : i32
    scf.if %33 {
      %37 = arith.extf %3 : vector<8x32xbf16> to vector<8x32xf32>
      %38 = arith.extf %13 : vector<8x32xbf16> to vector<8x32xf32>
      %39 = arith.mulf %37, %38 : vector<8x32xf32>
      %cst_19 = arith.constant dense<0.000000e+00> : vector<8xf32>
      %40 = vector.multi_reduction <add>, %39, %cst_19 [1] : vector<8x32xf32> to vector<8xf32>
      %41 = vector.shape_cast %40 : vector<8xf32> to vector<8x1xf32>
      %c0_20 = arith.constant 0 : index
      %c0_21 = arith.constant 0 : index
      %42 = vector.load %arg8[%c0_20, %c0_21] : memref<8x1xf32, #tpu.memory_space<vmem>>, vector<8x1xf32>
      tpu.vector_store %arg8[%c0_20, %c0_21], %41 {strides = array<i32>} : memref<8x1xf32, #tpu.memory_space<vmem>>, vector<8x1xf32>,
    } else {
    }
    %c0_i32_17 = arith.constant 0 : i32
    %34 = arith.cmpi eq, %arg1, %c0_i32_17 : i32
    %35 = arith.extui %34 : i1 to i32
    %c0_i32_18 = arith.constant 0 : i32
    %36 = arith.cmpi ne, %35, %c0_i32_18 : i32
    scf.if %36 {
      %c0_19 = arith.constant 0 : index
      %c0_20 = arith.constant 0 : index
      %37 = vector.load %arg6[%c0_19, %c0_20] : memref<8x1xf32, #tpu.memory_space<vmem>>, vector<8x1xf32>
      %c0_21 = arith.constant 0 : index
      %c0_22 = arith.constant 0 : index
      %38 = vector.load %arg7[%c0_21, %c0_22] : memref<8x1xf32, #tpu.memory_space<vmem>>, vector<8x1xf32>
      %39 = math.log %38 : vector<8x1xf32>
      %40 = arith.addf %37, %39 : vector<8x1xf32>
      %c0_23 = arith.constant 0 : index
      %c0_24 = arith.constant 0 : index
      %41 = vector.load %arg8[%c0_23, %c0_24] : memref<8x1xf32, #tpu.memory_space<vmem>>, vector<8x1xf32>
      %42 = arith.subf %40, %41 : vector<8x1xf32>
      %c0_25 = arith.constant 0 : index
      %c0_26 = arith.constant 0 : index
      %43 = vector.load %arg4[%c0_25, %c0_26] : memref<8x1xf32, #tpu.memory_space<vmem>>, vector<8x1xf32>
      tpu.vector_store %arg4[%c0_25, %c0_26], %42 {strides = array<i32>} : memref<8x1xf32, #tpu.memory_space<vmem>>, vector<8x1xf32>,
    } else {
    }
    return
  }
  func.func @transform_0(%arg0: i32, %arg1: i32) -> (i32, i32) {
    %c0_i32 = arith.constant 0 : i32
    %c0_i32_0 = arith.constant 0 : i32
    return %arg0, %c0_i32 : i32, i32
  }
  func.func @transform_1(%arg0: i32, %arg1: i32) -> (i32, i32) {
    %c0_i32 = arith.constant 0 : i32
    %c0_i32_0 = arith.constant 0 : i32
    return %arg1, %c0_i32 : i32, i32
  }
  func.func @transform_2(%arg0: i32, %arg1: i32) -> (i32, i32) {
    %c0_i32 = arith.constant 0 : i32
    %c0_i32_0 = arith.constant 0 : i32
    return %arg0, %c0_i32 : i32, i32
  }
}

</mosaic_0001>

<llo_original>
// kernel: tpu_custom_call.1
$region0: #{tpu_custom_call.1}
  #allocation0 [shape = 'u32[]', space=smem, size = 0x4, offset = 0x4, fixed_abs, tag = 'smem constant byte address 0x4 - core index']
  #allocation1 [shape = 'u32[144,128]{1,0:T(1,128)}', space=vmem, size = 0x12000, scoped, tag = 'internal scratch']
  #allocation2 [shape = 'bf16[8,32]{1,0:T(8,128)(2,1)}', space=vmem, size = 0x800, scoped, tag = 'scratch operand']
  #allocation3 [shape = 'f32[8,1]{1,0:T(8,128)}', space=vmem, size = 0x1000, scoped, tag = 'scratch operand']
  #allocation4 [shape = 'f32[8,1]{1,0:T(8,128)}', space=vmem, size = 0x1000, scoped, tag = 'scratch operand']
  #allocation5 [shape = 'f32[8,1]{1,0:T(8,128)}', space=vmem, size = 0x1000, scoped, tag = 'scratch operand']
  %s0 = inlined_call_operand.hbm [shape: f32[8,32], index: 0, kind: input, shape index: {}]
  %s1 = inlined_call_operand.hbm [shape: f32[8,32], index: 1, kind: input, shape index: {}]
  %s2 = inlined_call_operand.vmem [shape: f32[8,1], index: 2, kind: output, shape index: {}]
  %s3 = sld [smem:[#allocation0]]
  $region38: #{tpu_custom_call.1} parent=0
    _
  %s5 = ssub.s32 1, %s3
  %s6 = scalar_select 0, %s5, %s3
  $region1: #{tpu_custom_call.1} parent=0
    #allocation6 [shape = 'u8[4096]{0}', space=vmem, size = 0x1000, scoped, tag = 'input window, operand 0, single buffered']
    #allocation7 [shape = 's32[1]{0}', space=sflag, size = 0x4, scoped, tag = 'scoped memory for tpu_custom_call.1']
    #allocation8 [shape = 'u8[4096]{0}', space=vmem, size = 0x1000, scoped, tag = 'input window, operand 1, single buffered']
    #allocation9 [shape = 's32[1]{0}', space=sflag, size = 0x4, scoped, tag = 'scoped memory for tpu_custom_call.1']
    %7 = vsyncpa [#allocation7], 0
    %8 = vsyncpa [#allocation9], 0
    // Predicated region
    $region2: #{tpu_custom_call.1} parent=1 // pred_check
      _
    $region3: #{tpu_custom_call.1} parent=1 // pred_check_branch
      %10 = sbr.rel (0) target = $region5
    $region4: #{tpu_custom_call.1} parent=1 // pred_region
      %s12 = ssub.s32 128, 128
      %13 = vsyncadd [#allocation7], %s12
      %s15 = sshll.u32 [#allocation6], 4
      %s16 = int_to_ptr.vmem [resolvable:$true] %s15
      %18 = dma.hbm_to_vmem [thread:$0]  %s0, 128, %s16, [#allocation7]
    $region5: #{tpu_custom_call.1} parent=1 // pred_fallthru
      _
    // Predicated region
    $region6: #{tpu_custom_call.1} parent=1 // pred_check
      _
    $region7: #{tpu_custom_call.1} parent=1 // pred_check_branch
      %20 = sbr.rel (0) target = $region9
    $region8: #{tpu_custom_call.1} parent=1 // pred_region
      %s22 = ssub.s32 128, 128
      %23 = vsyncadd [#allocation9], %s22
      %s25 = sshll.u32 [#allocation8], 4
      %s26 = int_to_ptr.vmem [resolvable:$true] %s25
      %28 = dma.hbm_to_vmem [thread:$0]  %s1, 128, %s26, [#allocation9]
    $region9: #{tpu_custom_call.1} parent=1 // pred_fallthru
      _
    // Predicated region
    $region10: #{tpu_custom_call.1} parent=1 // pred_check
      _
    $region11: #{tpu_custom_call.1} parent=1 // pred_check_branch
      %30 = sbr.rel (0) target = $region13
    $region12: #{tpu_custom_call.1} parent=1 // pred_region
      %31 = dma.done [#allocation7], 128
    $region13: #{tpu_custom_call.1} parent=1 // pred_fallthru
      _
    // Predicated region
    $region14: #{tpu_custom_call.1} parent=1 // pred_check
      _
    $region15: #{tpu_custom_call.1} parent=1 // pred_check_branch
      %33 = sbr.rel (0) target = $region17
    $region16: #{tpu_custom_call.1} parent=1 // pred_region
      %34 = dma.done [#allocation9], 128
    $region17: #{tpu_custom_call.1} parent=1 // pred_fallthru
      _
    %p36 = scmp.eq.s32.totalorder 0, 0
    // Predicated region
    $region18: #{tpu_custom_call.1} parent=1 // pred_check
      %p37 = pneg %p36
    $region19: #{tpu_custom_call.1} parent=1 // pred_check_branch
      %39 = sbr.rel (%p37) target = $region21
    $region20: #{tpu_custom_call.1} parent=1 // pred_region
      %vm40 = vcmask 7168
      %41 = vst.msk [vmem:[#allocation3] sm:$0xff] %vm40, -inf
      %42 = vst.msk [vmem:[#allocation4] sm:$0xff] %vm40, 0.0
      %v43 = vld [vmem:[#allocation6] sm:$0xff]
      %v44 = vmul.f32 %v43, %v43
      %vm45 = vcmask 261120
      %v46 = vsel %vm45, %v44, 0.0
      %47 = vadd.xlane.f32.xlu0 %v46
      %v48 = vpop.xlane.xlu0 %47
      %v49 = vmax.f32 %v48, 1e-24
      %v50 = vrsqrt.pop %v49
      %v51 = vmul.f32 %v43, %v50
      %v52 = vpack.c.bf16 %v51, %v51
      %vm53 = vcmask 257024
      %54 = vst.msk [vmem:[#allocation2] sm:$0xf] %vm53, %v52
    $region21: #{tpu_custom_call.1} parent=1 // pred_fallthru
      _
    %v55 = vld [vmem:[#allocation2] sm:$0xf]
    %v56 = vld [vmem:[#allocation8] sm:$0xff]
    %v57 = vmul.f32 %v56, %v56
    %vm58 = vcmask 261120
    %v59 = vsel %vm58, %v57, 0.0
    %60 = vadd.xlane.f32.xlu0 %v59
    %v61 = vpop.xlane.xlu0 %60
    %v62 = vmax.f32 %v61, 1e-24
    %v63 = vrsqrt.pop %v62
    %v64 = vmul.f32 %v56, %v63
    %v65 = vpack.c.bf16 %v64, %v64
    %v67 = vsel %vm58, %v55, 0
    %v70 = vsel %vm58, %v65, 0
    %72 = vmatprep.subr.bf16.mxu0 0
    %73 = vmatpush1.bf16.xpose.msra.mxu0 0
    %74 = vmatprep.subr.bf16.mxu0 0
    %75 = vmatpush1.bf16.xpose.msra.mxu0 0
    %76 = vmatprep.subr.bf16.mxu0 0
    %77 = vmatpush1.bf16.xpose.msra.mxu0 0
    %78 = vmatprep.subr.bf16.mxu0 0
    %79 = vmatpush1.bf16.xpose.msra.mxu0 0
    %80 = vmatprep.subr.bf16.mxu0 0
    %81 = vmatpush1.bf16.xpose.msra.mxu0 0
    %82 = vmatprep.subr.bf16.mxu0 0
    %83 = vmatpush1.bf16.xpose.msra.mxu0 0
    %84 = vmatprep.subr.bf16.mxu0 0
    %85 = vmatpush1.bf16.xpose.msra.mxu0 0
    %86 = vmatprep.subr.bf16.mxu0 0
    %87 = vmatpush1.bf16.xpose.msra.mxu0 %v70
    %88 = vmatprep.subr.bf16.mxu0 0
    %89 = vmatpush2.bf16.xpose.msra.mxu0 0
    %90 = vmatprep.subr.bf16.mxu0 0
    %91 = vmatpush2.bf16.xpose.msra.mxu0 0
    %92 = vmatprep.subr.bf16.mxu0 0
    %93 = vmatpush2.bf16.xpose.msra.mxu0 0
    %94 = vmatprep.subr.bf16.mxu0 0
    %95 = vmatpush2.bf16.xpose.msra.mxu0 0
    %96 = vmatprep.subr.bf16.mxu0 0
    %97 = vmatpush2.bf16.xpose.msra.mxu0 0
    %98 = vmatprep.subr.bf16.mxu0 0
    %99 = vmatpush2.bf16.xpose.msra.mxu0 0
    %100 = vmatprep.subr.bf16.mxu0 0
    %101 = vmatpush2.bf16.xpose.msra.mxu0 0
    %102 = vmatprep.subr.bf16.mxu0 0
    %103 = vmatpush2.bf16.xpose.msra.mxu0 0
    %104 = vmatprep.mubr.bf16.mxu0 0
    %105 = vmatmul.mubr.bf16.gmra.mxu0 %v67
    %v106 = vpop.f32.mrf.mxu0
    %v107 = vadd.f32 0.0, %v106
    %v108 = vpop.f32.mrf.mxu0
    %v109 = vpop.f32.mrf.mxu0
    %v110 = vpop.f32.mrf.mxu0
    %111 = vdwg.mxu0
    %v112 = vld [vmem:[#allocation3] sm:$0xff]
    %vm113 = vcmask 64512
    %v114 = vsel %vm113, %v107, -inf
    %115 = vmax.xlane.f32.xlu0 %v114
    %v116 = vpop.xlane.xlu0 %115
    %v117 = vmax.f32 %v112, %v116
    %v118 = vsub.f32 %v112, %v117
    %v119 = vmul.f32 %v118, 1.442695
    %v120 = vpow.pop %v119
    %v121 = vld [vmem:[#allocation4] sm:$0xff]
    %v122 = vmul.f32 %v120, %v121
    %124 = vset.pattern.permute.xlu0 0
    %125 = vperm.xlu0 %124, %v117
    %v126 = vpop.permute.xlu0 %125
    %v128 = vsub.f32 %v107, %v126
    %v129 = vmul.f32 %v128, 1.442695
    %v130 = vpow.pop %v129
    %v131 = vsel %vm113, %v130, 0.0
    %132 = vadd.xlane.f32.xlu0 %v131
    %v133 = vpop.xlane.xlu0 %132
    %v134 = vadd.f32 %v122, %v133
    %vm135 = vcmask 7168
    %136 = vst.msk [vmem:[#allocation4] sm:$0xff] %vm135, %v134
    %137 = vst.msk [vmem:[#allocation3] sm:$0xff] %vm135, %v117
    %p138 = scmp.eq.s32.totalorder 0, 0
    // Predicated region
    $region22: #{tpu_custom_call.1} parent=1 // pred_check
      %p139 = pneg %p138
    $region23: #{tpu_custom_call.1} parent=1 // pred_check_branch
      %141 = sbr.rel (%p139) target = $region25
    $region24: #{tpu_custom_call.1} parent=1 // pred_region
      %v142 = vunpack.c.l.bf16 %v55
      %v143 = vunpack.c.l.bf16 %v65
      %v144 = vmul.f32 %v142, %v143
      %v145 = vsel %vm58, %v144, 0.0
      %146 = vadd.xlane.f32.xlu0 %v145
      %v147 = vpop.xlane.xlu0 %146
      %148 = vst.msk [vmem:[#allocation5] sm:$0xff] %vm135, %v147
    $region25: #{tpu_custom_call.1} parent=1 // pred_fallthru
      _
    // Predicated region
    $region26: #{tpu_custom_call.1} parent=1 // pred_check
      %p149 = pneg %p36
    $region27: #{tpu_custom_call.1} parent=1 // pred_check_branch
      %151 = sbr.rel (%p149) target = $region29
    $region28: #{tpu_custom_call.1} parent=1 // pred_region
      %v152 = vld [vmem:[#allocation3] sm:$0xff]
      %v153 = vld [vmem:[#allocation4] sm:$0xff]
      %v154 = vlog2.pop %v153
      %v155 = vmul.f32 %v154, 0.6931472
      %v156 = vadd.f32 %v152, %v155
      %v157 = vld [vmem:[#allocation5] sm:$0xff]
      %v158 = vsub.f32 %v156, %v157
      %159 = vst.msk [vmem:[%s2] sm:$0xff] %vm135, %v158
    $region29: #{tpu_custom_call.1} parent=1 // pred_fallthru
      _
    // Predicated region
    $region30: #{tpu_custom_call.1} parent=1 // pred_check
      _
    $region31: #{tpu_custom_call.1} parent=1 // pred_check_branch
      %161 = sbr.rel (0) target = $region33
    $region32: #{tpu_custom_call.1} parent=1 // pred_region
      _
    $region33: #{tpu_custom_call.1} parent=1 // pred_fallthru
      _
    // Predicated region
    $region34: #{tpu_custom_call.1} parent=1 // pred_check
      _
    $region35: #{tpu_custom_call.1} parent=1 // pred_check_branch
      %163 = sbr.rel (0) target = $region37
    $region36: #{tpu_custom_call.1} parent=1 // pred_region
      _
    $region37: #{tpu_custom_call.1} parent=1 // pred_fallthru
      _
    %164 = vsyncpa [#allocation7], 1
    %165 = vsyncpa [#allocation9], 1

</llo_original>
